<compile_context>
chip_gen: v6e
topology: v6e:2x2x1
jax: 0.10.0
libtpu: 0.0.40
codegen_flags: <defaults>
</compile_context>

<pallas_src>
import jax
import jax.numpy as jnp
from jax.experimental import pallas as pl
from jax.experimental.pallas import tpu as pltpu

INPUT_DIM = 3      # feature1, feature2, feature3
ENCODING_DIM = 2
LANE = 128


def autoencoder_kernel(x_ref, w1_ref, b1_ref, w2_ref, b2_ref, o_ref):
    # x_ref / o_ref : (INPUT_DIM, S, LANE) VMEM tiles, batch on (sublane, lane).
    # w1_ref : (INPUT_DIM * ENCODING_DIM,) SMEM, row-major (in, out).
    # b1_ref : (ENCODING_DIM,) SMEM.
    # w2_ref : (ENCODING_DIM * INPUT_DIM,) SMEM, row-major (in, out).
    # b2_ref : (INPUT_DIM,) SMEM.
    xs = [x_ref[i].astype(jnp.float32) for i in range(INPUT_DIM)]  # each (S, LANE)

    # Encoder: h[j] = relu(sum_i w1[i, j] * x[i] + b1[j])  -- scalar-broadcast VPU FMAs.
    hs = []
    for j in range(ENCODING_DIM):
        acc = b1_ref[j] + w1_ref[0 * ENCODING_DIM + j] * xs[0]
        for i in range(1, INPUT_DIM):
            acc = acc + w1_ref[i * ENCODING_DIM + j] * xs[i]
        hs.append(jnp.maximum(acc, 0.0))

    # Decoder: y[k] = sigmoid(sum_j w2[j, k] * h[j] + b2[k]).
    # sigmoid(z) = 0.5 * tanh(0.5 * z) + 0.5  (single EUP op, no divide).
    # Rows are stored directly -- no concatenate, unmasked dense stores.
    for k in range(INPUT_DIM):
        acc = b2_ref[k] + w2_ref[0 * INPUT_DIM + k] * hs[0]
        for j in range(1, ENCODING_DIM):
            acc = acc + w2_ref[j * INPUT_DIM + k] * hs[j]
        o_ref[k] = (0.5 * jnp.tanh(0.5 * acc) + 0.5).astype(o_ref.dtype)


def autoencoder_forward_tiles(x_tiles, w1, b1, w2, b2, *, batch_tile=256 * 1024):
    """Core entry point on already lane-packed data.

    x_tiles: (INPUT_DIM, S, 128) feature-major activations (batch on sublane/lane).
    Returns the reconstruction in the same layout / dtype.
    """
    D, S_total, lane = x_tiles.shape
    assert D == INPUT_DIM and lane == LANE
    dtype = x_tiles.dtype
    itemsize = jnp.dtype(dtype).itemsize
    sub_mult = 8 * max(4 // itemsize, 1)          # f32 -> 8 sublanes, bf16 -> 16

    # ---- tile-size selection --------------------------------------------------
    # Keep the double-buffered (in + out) footprint under ~40 MiB so 2-deep
    # pipelining stays alive on v7x (64 MiB VMEM) and within v5e's scoped budget.
    vmem_budget = 40 << 20
    max_tile_s = vmem_budget // (4 * D * LANE * itemsize)
    max_tile_s = min(max_tile_s, max(batch_tile // LANE, sub_mult))
    max_tile_s = max((max_tile_s // sub_mult) * sub_mult, sub_mult)

    s_min = pl.cdiv(S_total, sub_mult) * sub_mult
    if s_min <= max_tile_s:
        tile_s, n_steps = s_min, 1
    else:
        # Balance the tile across steps so per-step padding waste stays small
        # (and multi-step grids let "parallel" shard across v7x's 2 TensorCores).
        n_steps = pl.cdiv(s_min, max_tile_s)
        tile_s = pl.cdiv(pl.cdiv(s_min, n_steps), sub_mult) * sub_mult
        n_steps = pl.cdiv(s_min, tile_s)
    s_pad = n_steps * tile_s

    if s_pad != S_total:
        x_tiles = jnp.pad(x_tiles, ((0, 0), (0, s_pad - S_total), (0, 0)))

    bytes_per_buf = D * tile_s * LANE * itemsize
    vmem_limit = int(min(max(4 * bytes_per_buf + (2 << 20), 16 << 20), 48 << 20))

    out = pl.pallas_call(
        autoencoder_kernel,
        out_shape=jax.ShapeDtypeStruct((D, s_pad, LANE), dtype),
        grid=(n_steps,),
        in_specs=[
            # activations: lane-dense (D, tile_s, 128) blocks over the batch
            pl.BlockSpec((D, tile_s, LANE), lambda i: (0, i, 0)),
            # parameters: tiny flattened arrays resident in SMEM (scalar reads)
            pl.BlockSpec(memory_space=pltpu.MemorySpace.SMEM),
            pl.BlockSpec(memory_space=pltpu.MemorySpace.SMEM),
            pl.BlockSpec(memory_space=pltpu.MemorySpace.SMEM),
            pl.BlockSpec(memory_space=pltpu.MemorySpace.SMEM),
        ],
        out_specs=pl.BlockSpec((D, tile_s, LANE), lambda i: (0, i, 0)),
        compiler_params=pltpu.CompilerParams(
            dimension_semantics=("parallel",),
            vmem_limit_bytes=vmem_limit,
        ),
    )(
        x_tiles,
        w1.reshape(-1).astype(jnp.float32),
        b1.reshape(-1).astype(jnp.float32),
        w2.reshape(-1).astype(jnp.float32),
        b2.reshape(-1).astype(jnp.float32),
    )
    return out[:, :S_total] if s_pad != S_total else out


def autoencoder_forward(x, w1, b1, w2, b2, *, batch_tile=256 * 1024):
    """x: (B, INPUT_DIM); w1: (INPUT_DIM, ENCODING_DIM); b1: (ENCODING_DIM,);
       w2: (ENCODING_DIM, INPUT_DIM); b2: (INPUT_DIM,). Returns (B, INPUT_DIM)."""
    B, D = x.shape
    assert D == INPUT_DIM
    itemsize = jnp.dtype(x.dtype).itemsize
    sub_mult = 8 * max(4 // itemsize, 1)
    slab = sub_mult * LANE                       # smallest dense (sublane, lane) slab
    B_pad = pl.cdiv(B, slab) * slab

    # Wrapper-side layout conversion (pad + transpose + reshape).  If your data is
    # already feature-major / lane-packed, call autoencoder_forward_tiles directly
    # and skip these extra HBM round trips.
    x_p = jnp.pad(x, ((0, B_pad - B), (0, 0)))            # (B_pad, D)
    x_t = x_p.T.reshape(D, B_pad // LANE, LANE)           # (D, S, 128)

    out_t = autoencoder_forward_tiles(x_t, w1, b1, w2, b2, batch_tile=batch_tile)

    # Slice (cheap) before the transpose back to (B, D); padded columns dropped.
    return out_t.reshape(D, B_pad)[:, :B].T


def reference_forward(x, w1, b1, w2, b2):
    h = jnp.maximum(x @ w1 + b1, 0.0)
    return jax.nn.sigmoid(h @ w2 + b2)


if __name__ == "__main__":
    key = jax.random.PRNGKey(0)
    k_x, k_w1, k_b1, k_w2, k_b2 = jax.random.split(key, 5)

    batch = 16
    # Input features in [0, 1), mimicking the original dataset (np.random.rand)
    x = jax.random.uniform(k_x, (batch, INPUT_DIM), dtype=jnp.float32)

    # Deterministic parameter init (synthetic, nn.Linear-like uniform bounds)
    bound1 = 1.0 / (INPUT_DIM ** 0.5)
    w1 = jax.random.uniform(k_w1, (INPUT_DIM, ENCODING_DIM),
                            minval=-bound1, maxval=bound1, dtype=jnp.float32)
    b1 = jax.random.uniform(k_b1, (ENCODING_DIM,),
                            minval=-bound1, maxval=bound1, dtype=jnp.float32)

    bound2 = 1.0 / (ENCODING_DIM ** 0.5)
    w2 = jax.random.uniform(k_w2, (ENCODING_DIM, INPUT_DIM),
                            minval=-bound2, maxval=bound2, dtype=jnp.float32)
    b2 = jax.random.uniform(k_b2, (INPUT_DIM,),
                            minval=-bound2, maxval=bound2, dtype=jnp.float32)

    out = jax.block_until_ready(autoencoder_forward(x, w1, b1, w2, b2))
    ref = reference_forward(x, w1, b1, w2, b2)

    assert out.shape == (batch, INPUT_DIM)
    assert jnp.allclose(out, ref, atol=1e-5, rtol=1e-5), "mismatch vs reference"

    print("KERNEL_OK")
</pallas_src>

<mosaic_0001>
module attributes {stable_mosaic.version = 11 : i64} {
  func.func @autoencoder_kernel(%arg0: i32, %arg1: memref<3x8x128xf32, #tpu.memory_space<vmem>>, %arg2: memref<6xf32, #tpu.memory_space<smem>>, %arg3: memref<2xf32, #tpu.memory_space<smem>>, %arg4: memref<6xf32, #tpu.memory_space<smem>>, %arg5: memref<3xf32, #tpu.memory_space<smem>>, %arg6: memref<3x8x128xf32, #tpu.memory_space<vmem>>) attributes {dimension_semantics = [#tpu.dimension_semantics<parallel>], iteration_bounds = array<i64: 1>, scalar_prefetch = 0 : i64, scratch_operands = 0 : i64, tpu.core_type = #tpu.core_type<tc>, window_params = [{transform_indices = @transform_0, window_bounds = array<i64: 3, 8, 128>}, {transform_indices = @transform_1, window_bounds = array<i64: 6>}, {transform_indices = @transform_2, window_bounds = array<i64: 2>}, {transform_indices = @transform_3, window_bounds = array<i64: 6>}, {transform_indices = @transform_4, window_bounds = array<i64: 3>}, {transform_indices = @transform_5, window_bounds = array<i64: 3, 8, 128>}]} {
    %c0 = arith.constant 0 : index
    %c0_0 = arith.constant 0 : index
    %c0_1 = arith.constant 0 : index
    %0 = vector.load %arg1[%c0, %c0_0, %c0_1] : memref<3x8x128xf32, #tpu.memory_space<vmem>>, vector<1x8x128xf32>
    %1 = vector.shape_cast %0 : vector<1x8x128xf32> to vector<8x128xf32>
    %c1 = arith.constant 1 : index
    %c0_2 = arith.constant 0 : index
    %c0_3 = arith.constant 0 : index
    %2 = vector.load %arg1[%c1, %c0_2, %c0_3] : memref<3x8x128xf32, #tpu.memory_space<vmem>>, vector<1x8x128xf32>
    %3 = vector.shape_cast %2 : vector<1x8x128xf32> to vector<8x128xf32>
    %c2 = arith.constant 2 : index
    %c0_4 = arith.constant 0 : index
    %c0_5 = arith.constant 0 : index
    %4 = vector.load %arg1[%c2, %c0_4, %c0_5] : memref<3x8x128xf32, #tpu.memory_space<vmem>>, vector<1x8x128xf32>
    %5 = vector.shape_cast %4 : vector<1x8x128xf32> to vector<8x128xf32>
    %c0_6 = arith.constant 0 : index
    %6 = memref.load %arg3[%c0_6] : memref<2xf32, #tpu.memory_space<smem>>
    %c0_7 = arith.constant 0 : index
    %7 = memref.load %arg2[%c0_7] : memref<6xf32, #tpu.memory_space<smem>>
    %8 = vector.broadcast %7 : f32 to vector<8x128xf32>
    %9 = arith.mulf %8, %1 : vector<8x128xf32>
    %10 = vector.broadcast %6 : f32 to vector<8x128xf32>
    %11 = arith.addf %10, %9 : vector<8x128xf32>
    %c2_8 = arith.constant 2 : index
    %12 = memref.load %arg2[%c2_8] : memref<6xf32, #tpu.memory_space<smem>>
    %13 = vector.broadcast %12 : f32 to vector<8x128xf32>
    %14 = arith.mulf %13, %3 : vector<8x128xf32>
    %15 = arith.addf %11, %14 : vector<8x128xf32>
    %c4 = arith.constant 4 : index
    %16 = memref.load %arg2[%c4] : memref<6xf32, #tpu.memory_space<smem>>
    %17 = vector.broadcast %16 : f32 to vector<8x128xf32>
    %18 = arith.mulf %17, %5 : vector<8x128xf32>
    %19 = arith.addf %15, %18 : vector<8x128xf32>
    %cst = arith.constant 0.000000e+00 : f32
    %20 = vector.broadcast %cst : f32 to vector<8x128xf32>
    %21 = arith.maximumf %19, %20 : vector<8x128xf32>
    %c1_9 = arith.constant 1 : index
    %22 = memref.load %arg3[%c1_9] : memref<2xf32, #tpu.memory_space<smem>>
    %c1_10 = arith.constant 1 : index
    %23 = memref.load %arg2[%c1_10] : memref<6xf32, #tpu.memory_space<smem>>
    %24 = vector.broadcast %23 : f32 to vector<8x128xf32>
    %25 = arith.mulf %24, %1 : vector<8x128xf32>
    %26 = vector.broadcast %22 : f32 to vector<8x128xf32>
    %27 = arith.addf %26, %25 : vector<8x128xf32>
    %c3 = arith.constant 3 : index
    %28 = memref.load %arg2[%c3] : memref<6xf32, #tpu.memory_space<smem>>
    %29 = vector.broadcast %28 : f32 to vector<8x128xf32>
    %30 = arith.mulf %29, %3 : vector<8x128xf32>
    %31 = arith.addf %27, %30 : vector<8x128xf32>
    %c5 = arith.constant 5 : index
    %32 = memref.load %arg2[%c5] : memref<6xf32, #tpu.memory_space<smem>>
    %33 = vector.broadcast %32 : f32 to vector<8x128xf32>
    %34 = arith.mulf %33, %5 : vector<8x128xf32>
    %35 = arith.addf %31, %34 : vector<8x128xf32>
    %cst_11 = arith.constant 0.000000e+00 : f32
    %36 = vector.broadcast %cst_11 : f32 to vector<8x128xf32>
    %37 = arith.maximumf %35, %36 : vector<8x128xf32>
    %c0_12 = arith.constant 0 : index
    %38 = memref.load %arg5[%c0_12] : memref<3xf32, #tpu.memory_space<smem>>
    %c0_13 = arith.constant 0 : index
    %39 = memref.load %arg4[%c0_13] : memref<6xf32, #tpu.memory_space<smem>>
    %40 = vector.broadcast %39 : f32 to vector<8x128xf32>
    %41 = arith.mulf %40, %21 : vector<8x128xf32>
    %42 = vector.broadcast %38 : f32 to vector<8x128xf32>
    %43 = arith.addf %42, %41 : vector<8x128xf32>
    %c3_14 = arith.constant 3 : index
    %44 = memref.load %arg4[%c3_14] : memref<6xf32, #tpu.memory_space<smem>>
    %45 = vector.broadcast %44 : f32 to vector<8x128xf32>
    %46 = arith.mulf %45, %37 : vector<8x128xf32>
    %47 = arith.addf %43, %46 : vector<8x128xf32>
    %cst_15 = arith.constant 5.000000e-01 : f32
    %48 = vector.broadcast %cst_15 : f32 to vector<8x128xf32>
    %49 = arith.mulf %48, %47 : vector<8x128xf32>
    %50 = math.tanh %49 : vector<8x128xf32>
    %cst_16 = arith.constant 5.000000e-01 : f32
    %51 = vector.broadcast %cst_16 : f32 to vector<8x128xf32>
    %52 = arith.mulf %51, %50 : vector<8x128xf32>
    %cst_17 = arith.constant 5.000000e-01 : f32
    %53 = vector.broadcast %cst_17 : f32 to vector<8x128xf32>
    %54 = arith.addf %52, %53 : vector<8x128xf32>
    %c0_18 = arith.constant 0 : index
    %c0_19 = arith.constant 0 : index
    %c0_20 = arith.constant 0 : index
    %55 = vector.load %arg6[%c0_18, %c0_19, %c0_20] : memref<3x8x128xf32, #tpu.memory_space<vmem>>, vector<1x8x128xf32>
    %56 = vector.shape_cast %55 : vector<1x8x128xf32> to vector<8x128xf32>
    %57 = vector.shape_cast %54 : vector<8x128xf32> to vector<1x8x128xf32>
    tpu.vector_store %arg6[%c0_18, %c0_19, %c0_20], %57 {strides = array<i32>} : memref<3x8x128xf32, #tpu.memory_space<vmem>>, vector<1x8x128xf32>,
    %c1_21 = arith.constant 1 : index
    %58 = memref.load %arg5[%c1_21] : memref<3xf32, #tpu.memory_space<smem>>
    %c1_22 = arith.constant 1 : index
    %59 = memref.load %arg4[%c1_22] : memref<6xf32, #tpu.memory_space<smem>>
    %60 = vector.broadcast %59 : f32 to vector<8x128xf32>
    %61 = arith.mulf %60, %21 : vector<8x128xf32>
    %62 = vector.broadcast %58 : f32 to vector<8x128xf32>
    %63 = arith.addf %62, %61 : vector<8x128xf32>
    %c4_23 = arith.constant 4 : index
    %64 = memref.load %arg4[%c4_23] : memref<6xf32, #tpu.memory_space<smem>>
    %65 = vector.broadcast %64 : f32 to vector<8x128xf32>
    %66 = arith.mulf %65, %37 : vector<8x128xf32>
    %67 = arith.addf %63, %66 : vector<8x128xf32>
    %cst_24 = arith.constant 5.000000e-01 : f32
    %68 = vector.broadcast %cst_24 : f32 to vector<8x128xf32>
    %69 = arith.mulf %68, %67 : vector<8x128xf32>
    %70 = math.tanh %69 : vector<8x128xf32>
    %cst_25 = arith.constant 5.000000e-01 : f32
    %71 = vector.broadcast %cst_25 : f32 to vector<8x128xf32>
    %72 = arith.mulf %71, %70 : vector<8x128xf32>
    %cst_26 = arith.constant 5.000000e-01 : f32
    %73 = vector.broadcast %cst_26 : f32 to vector<8x128xf32>
    %74 = arith.addf %72, %73 : vector<8x128xf32>
    %c1_27 = arith.constant 1 : index
    %c0_28 = arith.constant 0 : index
    %c0_29 = arith.constant 0 : index
    %75 = vector.load %arg6[%c1_27, %c0_28, %c0_29] : memref<3x8x128xf32, #tpu.memory_space<vmem>>, vector<1x8x128xf32>
    %76 = vector.shape_cast %75 : vector<1x8x128xf32> to vector<8x128xf32>
    %77 = vector.shape_cast %74 : vector<8x128xf32> to vector<1x8x128xf32>
    tpu.vector_store %arg6[%c1_27, %c0_28, %c0_29], %77 {strides = array<i32>} : memref<3x8x128xf32, #tpu.memory_space<vmem>>, vector<1x8x128xf32>,
    %c2_30 = arith.constant 2 : index
    %78 = memref.load %arg5[%c2_30] : memref<3xf32, #tpu.memory_space<smem>>
    %c2_31 = arith.constant 2 : index
    %79 = memref.load %arg4[%c2_31] : memref<6xf32, #tpu.memory_space<smem>>
    %80 = vector.broadcast %79 : f32 to vector<8x128xf32>
    %81 = arith.mulf %80, %21 : vector<8x128xf32>
    %82 = vector.broadcast %78 : f32 to vector<8x128xf32>
    %83 = arith.addf %82, %81 : vector<8x128xf32>
    %c5_32 = arith.constant 5 : index
    %84 = memref.load %arg4[%c5_32] : memref<6xf32, #tpu.memory_space<smem>>
    %85 = vector.broadcast %84 : f32 to vector<8x128xf32>
    %86 = arith.mulf %85, %37 : vector<8x128xf32>
    %87 = arith.addf %83, %86 : vector<8x128xf32>
    %cst_33 = arith.constant 5.000000e-01 : f32
    %88 = vector.broadcast %cst_33 : f32 to vector<8x128xf32>
    %89 = arith.mulf %88, %87 : vector<8x128xf32>
    %90 = math.tanh %89 : vector<8x128xf32>
    %cst_34 = arith.constant 5.000000e-01 : f32
    %91 = vector.broadcast %cst_34 : f32 to vector<8x128xf32>
    %92 = arith.mulf %91, %90 : vector<8x128xf32>
    %cst_35 = arith.constant 5.000000e-01 : f32
    %93 = vector.broadcast %cst_35 : f32 to vector<8x128xf32>
    %94 = arith.addf %92, %93 : vector<8x128xf32>
    %c2_36 = arith.constant 2 : index
    %c0_37 = arith.constant 0 : index
    %c0_38 = arith.constant 0 : index
    %95 = vector.load %arg6[%c2_36, %c0_37, %c0_38] : memref<3x8x128xf32, #tpu.memory_space<vmem>>, vector<1x8x128xf32>
    %96 = vector.shape_cast %95 : vector<1x8x128xf32> to vector<8x128xf32>
    %97 = vector.shape_cast %94 : vector<8x128xf32> to vector<1x8x128xf32>
    tpu.vector_store %arg6[%c2_36, %c0_37, %c0_38], %97 {strides = array<i32>} : memref<3x8x128xf32, #tpu.memory_space<vmem>>, vector<1x8x128xf32>,
    return
  }
  func.func @transform_0(%arg0: i32) -> (i32, i32, i32) {
    %c0_i32 = arith.constant 0 : i32
    %c0_i32_0 = arith.constant 0 : i32
    %c0_i32_1 = arith.constant 0 : i32
    return %c0_i32, %arg0, %c0_i32_0 : i32, i32, i32
  }
  func.func @transform_1(%arg0: i32) -> i32 {
    %c0_i32 = arith.constant 0 : i32
    %c0_i32_0 = arith.constant 0 : i32
    return %c0_i32 : i32
  }
  func.func @transform_2(%arg0: i32) -> i32 {
    %c0_i32 = arith.constant 0 : i32
    %c0_i32_0 = arith.constant 0 : i32
    return %c0_i32 : i32
  }
  func.func @transform_3(%arg0: i32) -> i32 {
    %c0_i32 = arith.constant 0 : i32
    %c0_i32_0 = arith.constant 0 : i32
    return %c0_i32 : i32
  }
  func.func @transform_4(%arg0: i32) -> i32 {
    %c0_i32 = arith.constant 0 : i32
    %c0_i32_0 = arith.constant 0 : i32
    return %c0_i32 : i32
  }
  func.func @transform_5(%arg0: i32) -> (i32, i32, i32) {
    %c0_i32 = arith.constant 0 : i32
    %c0_i32_0 = arith.constant 0 : i32
    %c0_i32_1 = arith.constant 0 : i32
    return %c0_i32, %arg0, %c0_i32_0 : i32, i32, i32
  }
}

</mosaic_0001>

<llo_original>
// kernel: tpu_custom_call.1
$region0: #{tpu_custom_call.1}
  #allocation0 [shape = 'u32[]', space=smem, size = 0x4, offset = 0x4, fixed_abs, tag = 'smem constant byte address 0x4 - core index']
  #allocation1 [shape = 'u32[144,128]{1,0:T(1,128)}', space=vmem, size = 0x12000, scoped, tag = 'internal scratch']
  %s0 = inlined_call_operand.hbm [shape: f32[3,8,128], index: 0, kind: input, shape index: {}]
  %s1 = inlined_call_operand.vmem [shape: f32[6], index: 1, kind: input, shape index: {}]
  %s2 = inlined_call_operand.vmem [shape: f32[2], index: 2, kind: input, shape index: {}]
  %s3 = inlined_call_operand.vmem [shape: f32[6], index: 3, kind: input, shape index: {}]
  %s4 = inlined_call_operand.vmem [shape: f32[3], index: 4, kind: input, shape index: {}]
  %s5 = inlined_call_operand.hbm [shape: f32[3,8,128], index: 5, kind: output, shape index: {}]
  %s6 = sld [smem:[#allocation0]]
  $region50: #{tpu_custom_call.1} parent=0
    _
  %s8 = ssub.s32 1, %s6
  %s9 = scalar_select 0, %s8, %s6
  $region1: #{tpu_custom_call.1} parent=0
    #allocation2 [shape = 'u8[12288]{0}', space=vmem, size = 0x3000, scoped, tag = 'input window, operand 0, single buffered']
    #allocation3 [shape = 's32[1]{0}', space=sflag, size = 0x4, scoped, tag = 'scoped memory for tpu_custom_call.1']
    #allocation4 [shape = 's32[1]{0}', space=sflag, size = 0x4, scoped, tag = 'scoped memory for tpu_custom_call.1']
    #allocation5 [shape = 's32[1]{0}', space=sflag, size = 0x4, scoped, tag = 'scoped memory for tpu_custom_call.1']
    #allocation6 [shape = 'u8[512]{0}', space=smem, size = 0x200, scoped, tag = 'input window, operand 1, single buffered']
    #allocation7 [shape = 'u8[512]{0}', space=smem, size = 0x200, scoped, tag = 'input window, operand 2, single buffered']
    #allocation8 [shape = 's32[1]{0}', space=sflag, size = 0x4, scoped, tag = 'scoped memory for tpu_custom_call.1']
    #allocation9 [shape = 'u8[512]{0}', space=smem, size = 0x200, scoped, tag = 'input window, operand 3, single buffered']
    #allocation10 [shape = 'u8[512]{0}', space=smem, size = 0x200, scoped, tag = 'input window, operand 4, single buffered']
    #allocation11 [shape = 's32[1]{0}', space=sflag, size = 0x4, scoped, tag = 'scoped memory for tpu_custom_call.1']
    #allocation12 [shape = 'u8[12288]{0}', space=vmem, size = 0x3000, scoped, tag = 'output window, operand 0, single buffered']
    %10 = vsyncpa [#allocation3], 0
    %11 = vsyncpa [#allocation5], 0
    %12 = vsyncpa [#allocation8], 0
    %13 = vsyncpa [#allocation11], 0
    %14 = vsyncpa [#allocation4], 0
    // Predicated region
    $region2: #{tpu_custom_call.1} parent=1 // pred_check
      _
    $region3: #{tpu_custom_call.1} parent=1 // pred_check_branch
      %16 = sbr.rel (0) target = $region5
    $region4: #{tpu_custom_call.1} parent=1 // pred_region
      %s18 = ssub.s32 384, 384
      %19 = vsyncadd [#allocation3], %s18
      %s20 = sshll.u32 [#allocation2], 4
      %s21 = int_to_ptr.vmem [resolvable:$true] %s20
      %26 = dma.hbm_to_vmem [thread:$0]  %s0, 384, %s21, [#allocation3], 128, 128, 8
    $region5: #{tpu_custom_call.1} parent=1 // pred_fallthru
      _
    // Predicated region
    $region6: #{tpu_custom_call.1} parent=1 // pred_check
      _
    $region7: #{tpu_custom_call.1} parent=1 // pred_check_branch
      %28 = sbr.rel (0) target = $region9
    $region8: #{tpu_custom_call.1} parent=1 // pred_region
      %s30 = ssub.s32 16, 16
      %31 = vsyncadd [#allocation5], %s30
      %s33 = sshll.u32 %s1, 4
      %s34 = int_to_ptr.vmem [resolvable:$true] %s33
      %36 = dma.vmem_to_smem %s34, 16, [#allocation6], [#allocation5]
    $region9: #{tpu_custom_call.1} parent=1 // pred_fallthru
      _
    // Predicated region
    $region10: #{tpu_custom_call.1} parent=1 // pred_check
      _
    $region11: #{tpu_custom_call.1} parent=1 // pred_check_branch
      %38 = sbr.rel (0) target = $region13
    $region12: #{tpu_custom_call.1} parent=1 // pred_region
      %s40 = ssub.s32 16, 16
      %41 = vsyncadd [#allocation8], %s40
      %s43 = sshll.u32 %s2, 4
      %s44 = int_to_ptr.vmem [resolvable:$true] %s43
      %46 = dma.vmem_to_smem %s44, 16, [#allocation7], [#allocation8]
    $region13: #{tpu_custom_call.1} parent=1 // pred_fallthru
      _
    // Predicated region
    $region14: #{tpu_custom_call.1} parent=1 // pred_check
      _
    $region15: #{tpu_custom_call.1} parent=1 // pred_check_branch
      %48 = sbr.rel (0) target = $region17
    $region16: #{tpu_custom_call.1} parent=1 // pred_region
      %s50 = ssub.s32 16, 16
      %51 = vsyncadd [#allocation8], %s50
      %s53 = sshll.u32 %s3, 4
      %s54 = int_to_ptr.vmem [resolvable:$true] %s53
      %56 = dma.vmem_to_smem %s54, 16, [#allocation9], [#allocation8]
    $region17: #{tpu_custom_call.1} parent=1 // pred_fallthru
      _
    // Predicated region
    $region18: #{tpu_custom_call.1} parent=1 // pred_check
      _
    $region19: #{tpu_custom_call.1} parent=1 // pred_check_branch
      %58 = sbr.rel (0) target = $region21
    $region20: #{tpu_custom_call.1} parent=1 // pred_region
      %s60 = ssub.s32 16, 16
      %61 = vsyncadd [#allocation11], %s60
      %s63 = sshll.u32 %s4, 4
      %s64 = int_to_ptr.vmem [resolvable:$true] %s63
      %66 = dma.vmem_to_smem %s64, 16, [#allocation10], [#allocation11]
    $region21: #{tpu_custom_call.1} parent=1 // pred_fallthru
      _
    // Predicated region
    $region22: #{tpu_custom_call.1} parent=1 // pred_check
      _
    $region23: #{tpu_custom_call.1} parent=1 // pred_check_branch
      %68 = sbr.rel (0) target = $region25
    $region24: #{tpu_custom_call.1} parent=1 // pred_region
      %69 = dma.done [#allocation3], 384
    $region25: #{tpu_custom_call.1} parent=1 // pred_fallthru
      _
    // Predicated region
    $region26: #{tpu_custom_call.1} parent=1 // pred_check
      _
    $region27: #{tpu_custom_call.1} parent=1 // pred_check_branch
      %71 = sbr.rel (0) target = $region29
    $region28: #{tpu_custom_call.1} parent=1 // pred_region
      %72 = dma.done [#allocation5], 16
    $region29: #{tpu_custom_call.1} parent=1 // pred_fallthru
      _
    // Predicated region
    $region30: #{tpu_custom_call.1} parent=1 // pred_check
      _
    $region31: #{tpu_custom_call.1} parent=1 // pred_check_branch
      %74 = sbr.rel (0) target = $region33
    $region32: #{tpu_custom_call.1} parent=1 // pred_region
      %75 = dma.done [#allocation8], 16
    $region33: #{tpu_custom_call.1} parent=1 // pred_fallthru
      _
    // Predicated region
    $region34: #{tpu_custom_call.1} parent=1 // pred_check
      _
    $region35: #{tpu_custom_call.1} parent=1 // pred_check_branch
      %77 = sbr.rel (0) target = $region37
    $region36: #{tpu_custom_call.1} parent=1 // pred_region
      %78 = dma.done [#allocation8], 16
    $region37: #{tpu_custom_call.1} parent=1 // pred_fallthru
      _
    // Predicated region
    $region38: #{tpu_custom_call.1} parent=1 // pred_check
      _
    $region39: #{tpu_custom_call.1} parent=1 // pred_check_branch
      %80 = sbr.rel (0) target = $region41
    $region40: #{tpu_custom_call.1} parent=1 // pred_region
      %81 = dma.done [#allocation11], 16
    $region41: #{tpu_custom_call.1} parent=1 // pred_fallthru
      _
    %82 = sfence
    %v83 = vld [vmem:[#allocation2] sm:$0xff]
    %s84 = scalar_lea.vmem [#allocation2], 8
    %v85 = vld [vmem:[%s84] sm:$0xff]
    %s86 = scalar_lea.vmem [#allocation2], 16
    %v87 = vld [vmem:[%s86] sm:$0xff]
    %s88 = sld [smem:[#allocation7]]
    %s89 = sld [smem:[#allocation6]]
    %v90 = vstv %s89
    %v91 = vmul.f32 %v90, %v83
    %v92 = vstv %s88
    %v93 = vadd.f32 %v92, %v91
    %s94 = sld [smem:[#allocation6 + $0x2]]
    %v95 = vstv %s94
    %v96 = vmul.f32 %v95, %v85
    %v97 = vadd.f32 %v93, %v96
    %s98 = sld [smem:[#allocation6 + $0x4]]
    %v99 = vstv %s98
    %v100 = vmul.f32 %v99, %v87
    %v101 = vadd.f32 %v97, %v100
    %v102 = vmax.f32 %v101, 0.0
    %s103 = sld [smem:[#allocation7 + $0x1]]
    %s104 = sld [smem:[#allocation6 + $0x1]]
    %v105 = vstv %s104
    %v106 = vmul.f32 %v105, %v83
    %v107 = vstv %s103
    %v108 = vadd.f32 %v107, %v106
    %s109 = sld [smem:[#allocation6 + $0x3]]
    %v110 = vstv %s109
    %v111 = vmul.f32 %v110, %v85
    %v112 = vadd.f32 %v108, %v111
    %s113 = sld [smem:[#allocation6 + $0x5]]
    %v114 = vstv %s113
    %v115 = vmul.f32 %v114, %v87
    %v116 = vadd.f32 %v112, %v115
    %v117 = vmax.f32 %v116, 0.0
    %s118 = sld [smem:[#allocation10]]
    %s119 = sld [smem:[#allocation9]]
    %v120 = vstv %s119
    %v121 = vmul.f32 %v120, %v102
    %v122 = vstv %s118
    %v123 = vadd.f32 %v122, %v121
    %s124 = sld [smem:[#allocation9 + $0x3]]
    %v125 = vstv %s124
    %v126 = vmul.f32 %v125, %v117
    %v127 = vadd.f32 %v123, %v126
    %v128 = vmul.f32 %v127, 0.5
    %v129 = vtanh.pop %v128
    %v130 = vmul.f32 %v129, 0.5
    %v131 = vadd.f32 %v130, 0.5
    %132 = vst [vmem:[#allocation12] sm:$0xff] %v131
    %s133 = sld [smem:[#allocation10 + $0x1]]
    %s134 = sld [smem:[#allocation9 + $0x1]]
    %v135 = vstv %s134
    %v136 = vmul.f32 %v135, %v102
    %v137 = vstv %s133
    %v138 = vadd.f32 %v137, %v136
    %s139 = sld [smem:[#allocation9 + $0x4]]
    %v140 = vstv %s139
    %v141 = vmul.f32 %v140, %v117
    %v142 = vadd.f32 %v138, %v141
    %v143 = vmul.f32 %v142, 0.5
    %v144 = vtanh.pop %v143
    %v145 = vmul.f32 %v144, 0.5
    %v146 = vadd.f32 %v145, 0.5
    %s147 = scalar_lea.vmem [#allocation12], 8
    %148 = vst [vmem:[%s147] sm:$0xff] %v146
    %s149 = sld [smem:[#allocation10 + $0x2]]
    %s150 = sld [smem:[#allocation9 + $0x2]]
    %v151 = vstv %s150
    %v152 = vmul.f32 %v151, %v102
    %v153 = vstv %s149
    %v154 = vadd.f32 %v153, %v152
    %s155 = sld [smem:[#allocation9 + $0x5]]
    %v156 = vstv %s155
    %v157 = vmul.f32 %v156, %v117
    %v158 = vadd.f32 %v154, %v157
    %v159 = vmul.f32 %v158, 0.5
    %v160 = vtanh.pop %v159
    %v161 = vmul.f32 %v160, 0.5
    %v162 = vadd.f32 %v161, 0.5
    %s163 = scalar_lea.vmem [#allocation12], 16
    %164 = vst [vmem:[%s163] sm:$0xff] %v162
    // Predicated region
    $region42: #{tpu_custom_call.1} parent=1 // pred_check
      _
    $region43: #{tpu_custom_call.1} parent=1 // pred_check_branch
      %166 = sbr.rel (0) target = $region45
    $region44: #{tpu_custom_call.1} parent=1 // pred_region
      %s168 = ssub.s32 384, 384
      %169 = vsyncadd [#allocation4], %s168
      %s170 = sshll.u32 [#allocation12], 4
      %s171 = int_to_ptr.vmem [resolvable:$true] %s170
      %176 = dma.vmem_to_hbm [thread:$0]  %s171, 384, %s5, [#allocation4], 128, 128, 8
    $region45: #{tpu_custom_call.1} parent=1 // pred_fallthru
      _
    // Predicated region
    $region46: #{tpu_custom_call.1} parent=1 // pred_check
      _
    $region47: #{tpu_custom_call.1} parent=1 // pred_check_branch
      %178 = sbr.rel (0) target = $region49
    $region48: #{tpu_custom_call.1} parent=1 // pred_region
      %179 = dma.done [#allocation4], 384
    $region49: #{tpu_custom_call.1} parent=1 // pred_fallthru
      _
    %180 = vsyncpa [#allocation3], 1
    %181 = vsyncpa [#allocation4], 1
    %182 = vsyncpa [#allocation5], 1
    %183 = vsyncpa [#allocation8], 1
    %184 = vsyncpa [#allocation11], 1

</llo_original>
